<compile_context>
chip_gen: v7x
topology: tpu7x:2x2x1
jax: 0.10.0
libtpu: 0.0.40
codegen_flags: <defaults>
</compile_context>

<pallas_src>
import math

import jax
import jax.numpy as jnp
from jax.experimental import pallas as pl
from jax.experimental.pallas import tpu as pltpu


# --------------------------------------------------------------------------- #
# Setup (parameter construction, done once)
# --------------------------------------------------------------------------- #
def make_position_weights(max_seq_length: int, embed_dim: int, k: int = 10000):
    """Deterministic sinusoidal table, identical to the PyTorch __init__ math."""
    pos = jnp.arange(max_seq_length, dtype=jnp.float32).reshape(-1, 1)        # (L, 1)
    i = jnp.arange(embed_dim, dtype=jnp.float32).reshape(1, -1)               # (1, D)
    denom = jnp.exp(-math.log(k) * (2.0 * jnp.floor(i / 2.0) / embed_dim))    # (1, D)
    angles = pos * denom                                                       # (L, D)
    idx = jnp.arange(embed_dim)
    is_even = (idx % 2 == 0)
    pw = jnp.where(is_even[None, :], jnp.sin(angles), jnp.cos(angles))
    return pw.astype(jnp.float32)                                              # (L, D)


def make_position_embedding(max_seq_length: int, embed_dim: int,
                            k: int = 10000, dtype=jnp.float32):
    """Precompute the lane-dense flattened positional table (1, L*D) in `dtype`.

    Row-major flatten => the first S*D columns equal position_weights[:S, :],
    so the forward pass never needs a per-call slice/cast/reshape.
    """
    pw = make_position_weights(max_seq_length, embed_dim, k)                  # (L, D) f32
    return pw.astype(dtype).reshape(1, max_seq_length * embed_dim)            # (1, L*D)


# --------------------------------------------------------------------------- #
# Kernel
# --------------------------------------------------------------------------- #
def _add_pos_kernel(emb_ref, pos_ref, out_ref):
    # emb_ref/out_ref: (B, TF) blocks; pos_ref: (1, TF) block.
    # pos broadcasts over the B sublanes; explicit cast keeps the store dtype exact.
    out_ref[...] = (emb_ref[...] + pos_ref[...]).astype(out_ref.dtype)


# --------------------------------------------------------------------------- #
# Tiling helpers
# --------------------------------------------------------------------------- #
def _vmem_capacity_bytes() -> int:
    """Chip VMEM capacity; conservative (v7x per-TC) fallback if unavailable."""
    try:
        info = pltpu.get_tpu_info()
        cap = int(getattr(info, "vmem_capacity_bytes", 0))
        if cap > 0:
            return cap
    except Exception:
        pass
    return 64 * 1024 * 1024


def _min_sublanes(itemsize: int) -> int:
    # VMEM native tiles: (8,128) f32, (16,128) bf16/f16, (32,128) int8/fp8.
    return max(8, 32 // max(1, itemsize))


def _pick_tile(total_cols: int, batch: int, itemsize: int,
               budget_bytes: int, min_steps: int = 2) -> int:
    """Largest lane-dense tile width whose *padded*, double-buffered pipeline
    footprint (2x emb + 2x out blocks of pad(B) rows, 2x pos block of min_sub
    rows) fits the VMEM budget, while guaranteeing >= min_steps balanced grid
    steps when the flattened width allows it (128-multiple)."""
    min_sub = _min_sublanes(itemsize)
    pad_b = -(-batch // min_sub) * min_sub
    bytes_per_col = (4 * pad_b + 2 * min_sub) * itemsize
    max_cols = max(128, (budget_bytes // bytes_per_col // 128) * 128)

    if total_cols % 128 != 0:
        # Ragged flattened width: full width if it fits (always layout-legal),
        # otherwise a 128-multiple tile with a masked final block.
        return total_cols if total_cols <= max_cols else max_cols

    total_chunks = total_cols // 128
    max_chunks = max(1, max_cols // 128)
    steps = max(1, -(-total_chunks // max_chunks))        # enough steps to fit VMEM
    if total_chunks >= min_steps:
        steps = max(steps, min_steps)                     # >=2 steps -> both TCs on v7x
    chunks_per_step = -(-total_chunks // steps)           # near-balanced split
    return chunks_per_step * 128


# --------------------------------------------------------------------------- #
# Forward
# --------------------------------------------------------------------------- #
def position_embedding_forward(embeddings, pos_flat, *, donate_embeddings: bool = False):
    """embeddings: (B, S, D); pos_flat: (1, L*D) from make_position_embedding.

    Sequences shorter than the initialized max length L are allowed (S <= L).
    """
    B, S, D = embeddings.shape
    dtype = embeddings.dtype
    itemsize = jnp.dtype(dtype).itemsize
    F = S * D

    L_total = pos_flat.shape[1]
    if L_total % D != 0 or S * D > L_total:
        raise ValueError(
            f"sequence length {S} exceeds max_seq_length {L_total // max(D, 1)} "
            f"(pos table has {L_total} flattened columns, need {S * D})")
    if pos_flat.dtype != dtype:
        pos_flat = pos_flat.astype(dtype)  # fallback; prefer matching dtype at setup

    emb2d = embeddings.reshape(B, F)

    capacity = _vmem_capacity_bytes()
    budget = int(capacity * 0.4)           # padded double-buffered block budget
    vmem_limit = int(capacity * 0.5)       # headroom above the budget

    TF = _pick_tile(F, B, itemsize, budget)
    grid = (pl.cdiv(F, TF),)

    if F % 128 == 0:
        # Pass the full flattened table: the grid only covers the first F
        # columns, so the tail (positions >= S) is never DMA'd.
        pos_in = pos_flat
    else:
        # Ragged F: slice so a full-width block stays layout-legal.
        pos_in = pos_flat[:, :F]

    kwargs = {}
    if donate_embeddings:
        kwargs["input_output_aliases"] = {0: 0}   # emb2d buffer reused for output

    out2d = pl.pallas_call(
        _add_pos_kernel,
        out_shape=jax.ShapeDtypeStruct((B, F), dtype),
        grid_spec=pltpu.PrefetchScalarGridSpec(
            num_scalar_prefetch=0,
            grid=grid,
            in_specs=[
                pl.BlockSpec((B, TF), lambda t: (0, t)),   # embeddings tile
                pl.BlockSpec((1, TF), lambda t: (0, t)),   # positional tile
            ],
            out_specs=pl.BlockSpec((B, TF), lambda t: (0, t)),
        ),
        compiler_params=pltpu.CompilerParams(
            # Independent output tiles -> shard the flattened axis across TCs
            # on v7x (>=2 balanced steps guaranteed by _pick_tile); no-op on
            # single-TC v5e/v6e.
            dimension_semantics=("parallel",),
            vmem_limit_bytes=vmem_limit,
        ),
        cost_estimate=pl.CostEstimate(
            flops=B * F,
            transcendentals=0,
            bytes_accessed=(2 * B * F + F) * itemsize,
        ),
        **kwargs,
    )(emb2d, pos_in)

    return out2d.reshape(B, S, D)


# --------------------------------------------------------------------------- #
# Demo / correctness check
# --------------------------------------------------------------------------- #
if __name__ == "__main__":
    # Small shapes consistent with the module's forward.
    batch = 2
    seq = 8
    embed_dim = 32
    max_seq_length = 16  # sequences shorter than max_seq_length are allowed

    key = jax.random.PRNGKey(0)
    embeddings = jax.random.normal(key, (batch, seq, embed_dim), dtype=jnp.float32)

    # Setup (once): builds + flattens + casts the sinusoidal table.
    pos_flat = make_position_embedding(max_seq_length, embed_dim, k=10000,
                                       dtype=embeddings.dtype)

    out = position_embedding_forward(embeddings, pos_flat)
    out = jax.block_until_ready(out)

    # Reference check (pure JAX) for correctness.
    position_weights = make_position_weights(max_seq_length, embed_dim, k=10000)
    ref = embeddings + position_weights[:seq, :]
    assert out.shape == (batch, seq, embed_dim)
    assert jnp.allclose(out, ref, atol=1e-6), "mismatch vs reference"

    print("KERNEL_OK")
</pallas_src>

<mosaic_0001>
module attributes {stable_mosaic.version = 11 : i64} {
  func.func @_add_pos_kernel(%arg0: i32, %arg1: memref<2x128xf32, #tpu.memory_space<vmem>>, %arg2: memref<1x128xf32, #tpu.memory_space<vmem>>, %arg3: memref<2x128xf32, #tpu.memory_space<vmem>>) attributes {dimension_semantics = [#tpu.dimension_semantics<parallel>], iteration_bounds = array<i64: 2>, scalar_prefetch = 0 : i64, scratch_operands = 0 : i64, tpu.core_type = #tpu.core_type<tc>, window_params = [{transform_indices = @transform_0, window_bounds = array<i64: 2, 128>}, {transform_indices = @transform_1, window_bounds = array<i64: 1, 128>}, {transform_indices = @transform_2, window_bounds = array<i64: 2, 128>}]} {
    %c0 = arith.constant 0 : index
    %c0_0 = arith.constant 0 : index
    %0 = vector.load %arg1[%c0, %c0_0] : memref<2x128xf32, #tpu.memory_space<vmem>>, vector<2x128xf32>
    %c0_1 = arith.constant 0 : index
    %c0_2 = arith.constant 0 : index
    %1 = vector.load %arg2[%c0_1, %c0_2] : memref<1x128xf32, #tpu.memory_space<vmem>>, vector<1x128xf32>
    %2 = vector.broadcast %1 : vector<1x128xf32> to vector<2x128xf32>
    %3 = arith.addf %0, %2 : vector<2x128xf32>
    %c0_3 = arith.constant 0 : index
    %c0_4 = arith.constant 0 : index
    %4 = vector.load %arg3[%c0_3, %c0_4] : memref<2x128xf32, #tpu.memory_space<vmem>>, vector<2x128xf32>
    tpu.vector_store %arg3[%c0_3, %c0_4], %3 {strides = array<i32>} : memref<2x128xf32, #tpu.memory_space<vmem>>, vector<2x128xf32>,
    return
  }
  func.func @transform_0(%arg0: i32) -> (i32, i32) {
    %c0_i32 = arith.constant 0 : i32
    %c0_i32_0 = arith.constant 0 : i32
    return %c0_i32, %arg0 : i32, i32
  }
  func.func @transform_1(%arg0: i32) -> (i32, i32) {
    %c0_i32 = arith.constant 0 : i32
    %c0_i32_0 = arith.constant 0 : i32
    return %c0_i32, %arg0 : i32, i32
  }
  func.func @transform_2(%arg0: i32) -> (i32, i32) {
    %c0_i32 = arith.constant 0 : i32
    %c0_i32_0 = arith.constant 0 : i32
    return %c0_i32, %arg0 : i32, i32
  }
}

</mosaic_0001>

<llo_original>
// kernel: tpu_custom_call.1
$region0: #{tpu_custom_call.1}
  #allocation0 [shape = 'u32[]', space=smem, size = 0x4, offset = 0x4, fixed_abs, tag = 'smem constant byte address 0x4 - core index']
  #allocation1 [shape = 'u32[144,128]{1,0:T(1,128)}', space=vmem, size = 0x12000, scoped, tag = 'internal scratch']
  %s0 = inlined_call_operand.hbm [shape: f32[2,256], index: 0, kind: input, shape index: {}]
  %s1 = inlined_call_operand.hbm [shape: f32[1,512], index: 1, kind: input, shape index: {}]
  %s2 = inlined_call_operand.hbm [shape: f32[2,256], index: 2, kind: output, shape index: {}]
  %s3 = sld [smem:[#allocation0]]
  $region49: #{tpu_custom_call.1} parent=0
    _
  %s5 = ssub.s32 1, %s3
  %s6 = scalar_select 0, %s5, %s3
  $region1: #{tpu_custom_call.1} parent=0
    #allocation2 [shape = 'u8[2048]{0}', space=vmem, size = 0x800, scoped, tag = 'input window, operand 0']
    #allocation3 [shape = 's32[2]{0}', space=sflag, size = 0x8, scoped, tag = 'scoped memory for tpu_custom_call.1']
    #allocation4 [shape = 's32[2]{0}', space=sflag, size = 0x8, scoped, tag = 'scoped memory for tpu_custom_call.1']
    #allocation5 [shape = 'u8[1024]{0}', space=vmem, size = 0x400, scoped, tag = 'input window, operand 1']
    #allocation6 [shape = 's32[2]{0}', space=sflag, size = 0x8, scoped, tag = 'scoped memory for tpu_custom_call.1']
    #allocation7 [shape = 'u8[2048]{0}', space=vmem, size = 0x800, scoped, tag = 'output window, operand 0']
    %7 = vsyncpa [#allocation3], 0
    %s8 = scalar_lea.sflag [#allocation3], 1
    %9 = vsyncpa %s8, 0
    %10 = vsyncpa [#allocation6], 0
    %s11 = scalar_lea.sflag [#allocation6], 1
    %12 = vsyncpa %s11, 0
    %13 = vsyncpa [#allocation4], 0
    %s14 = scalar_lea.sflag [#allocation4], 1
    %15 = vsyncpa %s14, 0
    loop: start=0, step=1, limit=4
    $region2: #{tpu_custom_call.1} parent=1 // loop_pre_header
      _
    $region3: #{tpu_custom_call.1} parent=1 // loop_header
      %s17 = sphi 0, %s21
      %p18 = scmp.ge.s32.totalorder %s17, 4
      %s27 = sphi 0, %s29
      %s30 = sphi 0, %s27
      %s31 = sphi 0, %s30
      %s47 = sphi 0, %s31
      %s53 = sphi 0, %s55
      %s56 = sphi 0, %s53
      %s57 = sphi 0, %s56
      %s73 = sphi 0, %s57
      %s79 = sphi 0, %s81
      %s82 = sphi 0, %s79
      %s83 = sphi 0, %s82
      %s99 = sphi 0, %s83
    $region4: #{tpu_custom_call.1} parent=1 // loop_header_branch
      %20 = sbr.rel (%p18) target = $region8
    $region5: #{tpu_custom_call.1} parent=1 // loop_body
      %s22 = ssub.s32 %s17, 1
      %s23 = ssub.s32 %s17, 2
      %s24 = sadd.s32 %s17, 1
      %s25 = ssub.s32 %s17, %s24
      %p26 = scmp.eq.s32.totalorder %s25, 0
      %s28 = sadd.s32 %s27, 1
      %s29 = scalar_select %p26, %s27, %s28
      %p32 = pneg %p26
      %p33 = scmp.eq.s32.totalorder %s17, 1
      %p34 = por %p32, %p33
      %p35 = scmp.ne.s32.totalorder %s27, %s30
      %p36 = scmp.eq.s32.totalorder %s17, 0
      %p37 = por %p35, %p36
      %p38 = scmp.ne.s32.totalorder %s27, %s30
      %p39 = scmp.eq.s32.totalorder %s22, 1
      %p40 = por %p38, %p39
      %p41 = scmp.ne.s32.totalorder %s30, %s31
      %p42 = scmp.eq.s32.totalorder %s22, 0
      %p43 = por %p41, %p42
      %p44 = scmp.ne.s32.totalorder %s30, %s31
      %p45 = scmp.eq.s32.totalorder %s23, 1
      %p46 = por %p44, %p45
      %p48 = scmp.ne.s32.totalorder %s31, %s47
      %p49 = scmp.eq.s32.totalorder %s23, 0
      %p50 = por %p48, %p49
      %s51 = ssub.s32 %s17, %s24
      %p52 = scmp.eq.s32.totalorder %s51, 0
      %s54 = sadd.s32 %s53, 1
      %s55 = scalar_select %p52, %s53, %s54
      %p58 = pneg %p52
      %p59 = scmp.eq.s32.totalorder %s17, 1
      %p60 = por %p58, %p59
      %p61 = scmp.ne.s32.totalorder %s53, %s56
      %p62 = scmp.eq.s32.totalorder %s17, 0
      %p63 = por %p61, %p62
      %p64 = scmp.ne.s32.totalorder %s53, %s56
      %p65 = scmp.eq.s32.totalorder %s22, 1
      %p66 = por %p64, %p65
      %p67 = scmp.ne.s32.totalorder %s56, %s57
      %p68 = scmp.eq.s32.totalorder %s22, 0
      %p69 = por %p67, %p68
      %p70 = scmp.ne.s32.totalorder %s56, %s57
      %p71 = scmp.eq.s32.totalorder %s23, 1
      %p72 = por %p70, %p71
      %p74 = scmp.ne.s32.totalorder %s57, %s73
      %p75 = scmp.eq.s32.totalorder %s23, 0
      %p76 = por %p74, %p75
      %s77 = ssub.s32 %s17, %s24
      %p78 = scmp.eq.s32.totalorder %s77, 0
      %s80 = sadd.s32 %s79, 1
      %s81 = scalar_select %p78, %s79, %s80
      %p84 = pneg %p78
      %p85 = scmp.eq.s32.totalorder %s17, 1
      %p86 = por %p84, %p85
      %p87 = scmp.ne.s32.totalorder %s79, %s82
      %p88 = scmp.eq.s32.totalorder %s17, 0
      %p89 = por %p87, %p88
      %p90 = scmp.ne.s32.totalorder %s79, %s82
      %p91 = scmp.eq.s32.totalorder %s22, 1
      %p92 = por %p90, %p91
      %p93 = scmp.ne.s32.totalorder %s82, %s83
      %p94 = scmp.eq.s32.totalorder %s22, 0
      %p95 = por %p93, %p94
      %p96 = scmp.ne.s32.totalorder %s82, %s83
      %p97 = scmp.eq.s32.totalorder %s23, 1
      %p98 = por %p96, %p97
      %p100 = scmp.ne.s32.totalorder %s83, %s99
      %p101 = scmp.eq.s32.totalorder %s23, 0
      %p102 = por %p100, %p101
      %p103 = scmp.le.s32.totalorder 1, %s17
      %p104 = scmp.lt.s32.totalorder %s17, 3
      %p105 = pnand %p103, %p104
      %p106 = pneg %p105
      // Predicated region
      $region9: #{tpu_custom_call.1} parent=5 // pred_check
        _
      $region10: #{tpu_custom_call.1} parent=5 // pred_check_branch
        %108 = sbr.rel (%p105) target = $region12
      $region11: #{tpu_custom_call.1} parent=5 // pred_region
        %s109 = ssub.s32 %s17, 1
      $region12: #{tpu_custom_call.1} parent=5 // pred_fallthru
        _
      %p110 = scmp.lt.s32.totalorder %s17, 2
      // Predicated region
      $region13: #{tpu_custom_call.1} parent=5 // pred_check
        %p111 = pneg %p110
      $region14: #{tpu_custom_call.1} parent=5 // pred_check_branch
        %113 = sbr.rel (%p111) target = $region16
      $region15: #{tpu_custom_call.1} parent=5 // pred_region
        // Predicated region
        $region17: #{tpu_custom_call.1} parent=15 // pred_check
          %p114 = pneg %p37
        $region18: #{tpu_custom_call.1} parent=15 // pred_check_branch
          %116 = sbr.rel (%p114) target = $region20
        $region19: #{tpu_custom_call.1} parent=15 // pred_region
          %s117 = sand.u32 %s27, 1
          %s118 = scalar_lea.sflag [#allocation3], %s117
          %s119 = sand.u32 %s27, 1
          %s120 = smul.addr %s119, 2
          %s121 = scalar_lea.vmem [#allocation2], %s120
          %s123 = ssub.s32 32, 32
          %124 = vsyncadd %s118, %s123
          %s125 = smul.addr %s17, 32
          %s126 = scalar_lea.hbm %s0, %s125
          %s128 = sshll.u32 %s121, 4
          %s129 = int_to_ptr.vmem [resolvable:$true] %s128
          %131 = dma.hbm_to_vmem [thread:$0]  %s126, 32, %s129, %s118
        $region20: #{tpu_custom_call.1} parent=15 // pred_fallthru
          _
        // Predicated region
        $region21: #{tpu_custom_call.1} parent=15 // pred_check
          %p132 = pneg %p63
        $region22: #{tpu_custom_call.1} parent=15 // pred_check_branch
          %134 = sbr.rel (%p132) target = $region24
        $region23: #{tpu_custom_call.1} parent=15 // pred_region
          %s135 = sand.u32 %s53, 1
          %s136 = scalar_lea.sflag [#allocation6], %s135
          %s137 = sand.u32 %s53, 1
          %s138 = scalar_lea.vmem [#allocation5], %s137
          %s140 = ssub.s32 16, 16
          %141 = vsyncadd %s136, %s140
          %s142 = smul.addr %s17, 16
          %s143 = scalar_lea.hbm %s1, %s142
          %s145 = sshll.u32 %s138, 4
          %s146 = int_to_ptr.vmem [resolvable:$true] %s145
          %148 = dma.hbm_to_vmem [thread:$0]  %s143, 16, %s146, %s136
        $region24: #{tpu_custom_call.1} parent=15 // pred_fallthru
          _
      $region16: #{tpu_custom_call.1} parent=5 // pred_fallthru
        _
      %p149 = scmp.le.s32.totalorder 1, %s17
      %p150 = scmp.lt.s32.totalorder %s17, 3
      %p151 = pnand %p149, %p150
      %p152 = pneg %p151
      // Predicated region
      $region25: #{tpu_custom_call.1} parent=5 // pred_check
        _
      $region26: #{tpu_custom_call.1} parent=5 // pred_check_branch
        %154 = sbr.rel (%p151) target = $region28
      $region27: #{tpu_custom_call.1} parent=5 // pred_region
        %s155 = ssub.s32 %s17, 1
        %s156 = sand.u32 %s30, 1
        %s157 = scalar_lea.sflag [#allocation3], %s156
        %s158 = sand.u32 %s30, 1
        %s159 = smul.addr %s158, 2
        %s160 = scalar_lea.vmem [#allocation2], %s159
        // Predicated region
        $region29: #{tpu_custom_call.1} parent=27 // pred_check
          %p161 = pneg %p43
        $region30: #{tpu_custom_call.1} parent=27 // pred_check_branch
          %163 = sbr.rel (%p161) target = $region32
        $region31: #{tpu_custom_call.1} parent=27 // pred_region
          %164 = dma.done %s157, 32
        $region32: #{tpu_custom_call.1} parent=27 // pred_fallthru
          _
        %s165 = sand.u32 %s56, 1
        %s166 = scalar_lea.sflag [#allocation6], %s165
        %s167 = sand.u32 %s56, 1
        %s168 = scalar_lea.vmem [#allocation5], %s167
        // Predicated region
        $region33: #{tpu_custom_call.1} parent=27 // pred_check
          %p169 = pneg %p69
        $region34: #{tpu_custom_call.1} parent=27 // pred_check_branch
          %171 = sbr.rel (%p169) target = $region36
        $region35: #{tpu_custom_call.1} parent=27 // pred_region
          %172 = dma.done %s166, 16
        $region36: #{tpu_custom_call.1} parent=27 // pred_fallthru
          _
        %s173 = sand.u32 %s30, 1
        %s174 = scalar_lea.sflag [#allocation3], %s173
        %s175 = sand.u32 %s30, 1
        %s176 = smul.addr %s175, 2
        %s177 = scalar_lea.vmem [#allocation2], %s176
        %p178 = pneg %p43
        %p179 = pneg %p40
        %s180 = sand.u32 %s56, 1
        %s181 = scalar_lea.sflag [#allocation6], %s180
        %s182 = sand.u32 %s56, 1
        %s183 = scalar_lea.vmem [#allocation5], %s182
        %p184 = pneg %p69
        %p185 = pneg %p66
        %p186 = pneg %p95
        %p187 = pneg %p92
        %s188 = sand.u32 %s82, 1
        %s189 = scalar_lea.sflag [#allocation4], %s188
        %s190 = sand.u32 %s82, 1
        %s191 = smul.addr %s190, 2
        %s192 = scalar_lea.vmem [#allocation7], %s191
        %v193 = vld [vmem:[%s160] sm:$0x3]
        %v194 = vld [vmem:[%s168] sm:$0x1]
        %v196 = vlaneseq
        %v197 = vshrl.u32 %v196, 7
        %v198 = vsub.s32 0, %v197
        %v199 = vrot.slane %v194, %v198
        %v201 = vadd.f32 %v193, %v199
        %202 = vst [vmem:[%s192] sm:$0x3] %v201
        %s203 = sand.u32 %s82, 1
        %s204 = scalar_lea.sflag [#allocation4], %s203
        %s205 = sand.u32 %s82, 1
        %s206 = smul.addr %s205, 2
        %s207 = scalar_lea.vmem [#allocation7], %s206
        // Predicated region
        $region37: #{tpu_custom_call.1} parent=27 // pred_check
          %p208 = pneg %p92
        $region38: #{tpu_custom_call.1} parent=27 // pred_check_branch
          %210 = sbr.rel (%p208) target = $region40
        $region39: #{tpu_custom_call.1} parent=27 // pred_region
          %s212 = ssub.s32 32, 32
          %213 = vsyncadd %s204, %s212
          %s214 = smul.addr %s22, 32
          %s215 = scalar_lea.hbm %s2, %s214
          %s217 = sshll.u32 %s207, 4
          %s218 = int_to_ptr.vmem [resolvable:$true] %s217
          %220 = dma.vmem_to_hbm [thread:$0]  %s218, 32, %s215, %s204
        $region40: #{tpu_custom_call.1} parent=27 // pred_fallthru
          _
      $region28: #{tpu_custom_call.1} parent=5 // pred_fallthru
        _
      %p221 = scmp.le.s32.totalorder 2, %s17
      // Predicated region
      $region41: #{tpu_custom_call.1} parent=5 // pred_check
        %p222 = pneg %p221
      $region42: #{tpu_custom_call.1} parent=5 // pred_check_branch
        %224 = sbr.rel (%p222) target = $region44
      $region43: #{tpu_custom_call.1} parent=5 // pred_region
        %s225 = ssub.s32 %s17, 2
        // Predicated region
        $region45: #{tpu_custom_call.1} parent=43 // pred_check
          %p226 = pneg %p98
        $region46: #{tpu_custom_call.1} parent=43 // pred_check_branch
          %228 = sbr.rel (%p226) target = $region48
        $region47: #{tpu_custom_call.1} parent=43 // pred_region
          %s229 = sand.u32 %s83, 1
          %s230 = scalar_lea.sflag [#allocation4], %s229
          %s231 = sand.u32 %s83, 1
          %s232 = smul.addr %s231, 2
          %s233 = scalar_lea.vmem [#allocation7], %s232
          %234 = dma.done %s230, 32
        $region48: #{tpu_custom_call.1} parent=43 // pred_fallthru
          _
      $region44: #{tpu_custom_call.1} parent=5 // pred_fallthru
        _
    $region6: #{tpu_custom_call.1} parent=1 // loop_footer
      %s21 = sadd.s32 1, %s17
    $region7: #{tpu_custom_call.1} parent=1 // loop_footer_branch
      %16 = sbr.rel target = $region3
    $region8: #{tpu_custom_call.1} parent=1 // loop_exit
      _
    %235 = vsyncpa [#allocation3], 1
    %s236 = scalar_lea.sflag [#allocation3], 1
    %237 = vsyncpa %s236, 1
    %238 = vsyncpa [#allocation6], 1
    %s239 = scalar_lea.sflag [#allocation6], 1
    %240 = vsyncpa %s239, 1
    %241 = vsyncpa [#allocation4], 1
    %s242 = scalar_lea.sflag [#allocation4], 1
    %243 = vsyncpa %s242, 1

</llo_original>
